<compile_context>
chip_gen: v5e
topology: v5e:2x2
jax: 0.10.0
libtpu: 0.0.40
codegen_flags: <defaults>
</compile_context>

<pallas_src>
import functools

import numpy as np
import jax
import jax.numpy as jnp
from jax import lax
from jax.experimental import pallas as pl
from jax.experimental.pallas import tpu as pltpu

EPS = 1e-5


# ------------------------------- Pallas kernel -------------------------------
def resnet_block2_kernel(x_ref, w1_ref, w2_ref, w3_ref,
                         b1_ref, b2_ref, b3_ref, o_ref, *, seq_len):
    # x block: (rows, Ci) where rows = nb * seq_len (whole sequences only).
    x = x_ref[...]                                   # compute dtype
    x_f32 = x.astype(jnp.float32)
    rows = x.shape[0]

    # ---- conv1 (k=1), BN folded into w1/b1, ReLU ----------------------------
    y1 = jnp.dot(x, w1_ref[...], preferred_element_type=jnp.float32)
    y1 = jnp.maximum(y1 + b1_ref[...], 0.0)          # (rows, C1) f32

    # ---- conv2 (k=3, 'same'), BN folded, ReLU --------------------------------
    # Shifted copies of y1 via zero-padded sublane slices (no L x L matmuls),
    # zeroed at per-sequence boundaries (mask from in-kernel iota; blocks hold
    # whole sequences so position-within-sequence = row % L), then ONE fused
    # MXU matmul against w2 laid out as (3*C1, C1) = concat over the 3 taps.
    C1 = y1.shape[1]
    pos = lax.broadcasted_iota(jnp.int32, (rows, 1), 0) % seq_len
    zero_row = jnp.zeros((1, C1), jnp.float32)
    y1_prev = jnp.where(pos != 0,
                        jnp.concatenate([zero_row, y1[:-1, :]], axis=0), 0.0)
    y1_next = jnp.where(pos != seq_len - 1,
                        jnp.concatenate([y1[1:, :], zero_row], axis=0), 0.0)
    y1_cat = jnp.concatenate([y1_prev, y1, y1_next], axis=-1)   # (rows, 3*C1)

    y2 = jnp.dot(y1_cat.astype(w2_ref.dtype), w2_ref[...],
                 preferred_element_type=jnp.float32)
    y2 = jnp.maximum(y2 + b2_ref[...], 0.0)          # (rows, C1)

    # ---- conv3 (k=1), BN folded ---------------------------------------------
    y3 = jnp.dot(y2.astype(w3_ref.dtype), w3_ref[...],
                 preferred_element_type=jnp.float32)
    y3 = y3 + b3_ref[...]                            # (rows, Ci)

    # ---- residual add + ReLU -------------------------------------------------
    o_ref[...] = jnp.maximum(x_f32 + y3, 0.0).astype(o_ref.dtype)


# --------------------------------- wrapper -----------------------------------
def fold_bn(gamma, beta, mean, var):
    scale = gamma / jnp.sqrt(var + EPS)
    bias = beta - mean * scale
    return scale[None, :], bias[None, :]             # (1, C) each


def _pick_batch_block(N, L, target_rows=512):
    """Largest divisor of N whose row block fits the budget; prefer >=2 grid
    steps so the two v7x TensorCores both get work."""
    best = 1
    for nb in range(1, N + 1):
        if N % nb == 0 and nb * L <= target_rows:
            best = nb
    if N // best < 2:
        smaller = [d for d in range(1, best) if N % d == 0]
        if smaller and N // smaller[-1] >= 2:
            best = smaller[-1]
    return best


def resnet_block2_pallas(x_ncl, params, *, batch_block=None,
                         compute_dtype=jnp.float32):
    """x_ncl: (N, Ci, L) float32 (PyTorch NCL layout).
    params: torch-style tensors
      (w1 (C1,Ci,1), g1,be1,m1,v1, w2 (C1,C1,3), g2,be2,m2,v2,
       w3 (Ci,C1,1), g3,be3,m3,v3).
    compute_dtype: jnp.bfloat16 recommended on v6e/v7x (f32 accumulation is
    kept regardless); f32 default for exactness."""
    (w1, g1, be1, m1, v1,
     w2, g2, be2, m2, v2,
     w3, g3, be3, m3, v3) = params

    N, Ci, L = x_ncl.shape
    assert Ci % 2 == 0
    C1 = Ci // 2

    # ---- fold BN into conv weights (host side, zero runtime cost) -----------
    s1, b1 = fold_bn(g1, be1, m1, v1)
    s2, b2 = fold_bn(g2, be2, m2, v2)
    s3, b3 = fold_bn(g3, be3, m3, v3)

    w1f = (jnp.transpose(w1[:, :, 0]) * s1).astype(compute_dtype)      # (Ci, C1)
    w2cat = jnp.concatenate([jnp.transpose(w2[:, :, k]) for k in range(3)],
                            axis=0) * s2                               # (3*C1, C1)
    w2cat = w2cat.astype(compute_dtype)
    w3f = (jnp.transpose(w3[:, :, 0]) * s3).astype(compute_dtype)      # (C1, Ci)
    b1 = b1.astype(jnp.float32)
    b2 = b2.astype(jnp.float32)
    b3 = b3.astype(jnp.float32)

    # ---- lay x out channels-last and flatten rows ---------------------------
    x_rows = jnp.transpose(x_ncl, (0, 2, 1)).reshape(N * L, Ci).astype(compute_dtype)

    nb = batch_block if batch_block is not None else _pick_batch_block(N, L)
    assert N % nb == 0, "batch_block must divide N"
    rows = nb * L
    assert rows % 8 == 0 or rows == N * L, "rows per block must be a multiple of 8"
    grid = (N // nb,)

    kernel = functools.partial(resnet_block2_kernel, seq_len=L)

    out = pl.pallas_call(
        kernel,
        out_shape=jax.ShapeDtypeStruct((N * L, Ci), x_ncl.dtype),
        grid_spec=pltpu.PrefetchScalarGridSpec(
            num_scalar_prefetch=0,
            grid=grid,
            in_specs=[
                pl.BlockSpec((rows, Ci), lambda n: (n, 0)),        # x rows
                pl.BlockSpec((Ci, C1), lambda n: (0, 0)),          # w1 (BN folded)
                pl.BlockSpec((3 * C1, C1), lambda n: (0, 0)),      # w2 (fused taps)
                pl.BlockSpec((C1, Ci), lambda n: (0, 0)),          # w3 (BN folded)
                pl.BlockSpec((1, C1), lambda n: (0, 0)),           # b1
                pl.BlockSpec((1, C1), lambda n: (0, 0)),           # b2
                pl.BlockSpec((1, Ci), lambda n: (0, 0)),           # b3
            ],
            out_specs=pl.BlockSpec((rows, Ci), lambda n: (n, 0)),
        ),
        compiler_params=pltpu.CompilerParams(
            dimension_semantics=("parallel",)),
    )(x_rows, w1f, w2cat, w3f, b1, b2, b3)

    return jnp.transpose(out.reshape(N, L, Ci), (0, 2, 1))          # back to NCL


# ---------------------------- pure-JAX reference -----------------------------
def _conv1d_ncl(x, w, pad):
    return lax.conv_general_dilated(
        x, w, window_strides=(1,), padding=[(pad, pad)],
        dimension_numbers=('NCH', 'OIH', 'NCH'))


def _bn_ncl(x, gamma, beta, mean, var):
    inv = gamma / jnp.sqrt(var + EPS)
    return (x - mean[None, :, None]) * inv[None, :, None] + beta[None, :, None]


def resnet_block2_ref(x_ncl, params):
    (w1, g1, be1, m1, v1,
     w2, g2, be2, m2, v2,
     w3, g3, be3, m3, v3) = params
    y = jax.nn.relu(_bn_ncl(_conv1d_ncl(x_ncl, w1, 0), g1, be1, m1, v1))
    y = jax.nn.relu(_bn_ncl(_conv1d_ncl(y, w2, 1), g2, be2, m2, v2))
    y = _bn_ncl(_conv1d_ncl(y, w3, 0), g3, be3, m3, v3)
    return jax.nn.relu(x_ncl + y)


# ----------------------------------- test ------------------------------------
def _bn_params(key, c):
    k1, k2, k3, k4 = jax.random.split(key, 4)
    gamma = 1.0 + 0.1 * jax.random.normal(k1, (c,), jnp.float32)
    beta = 0.1 * jax.random.normal(k2, (c,), jnp.float32)
    mean = 0.1 * jax.random.normal(k3, (c,), jnp.float32)
    var = 1.0 + 0.1 * jax.random.uniform(k4, (c,), jnp.float32)
    return gamma, beta, mean, var


if __name__ == "__main__":
    key = jax.random.PRNGKey(0)
    N, Ci, L = 4, 128, 64          # small, lane-dense (channels on lanes)
    C1 = Ci // 2

    ks = jax.random.split(key, 7)
    x_ncl = jax.random.normal(ks[0], (N, Ci, L), jnp.float32)   # PyTorch NCL

    # Conv weights in PyTorch layout (Cout, Cin, K), no bias.
    w1_t = 0.1 * jax.random.normal(ks[1], (C1, Ci, 1), jnp.float32)
    w2_t = 0.1 * jax.random.normal(ks[2], (C1, C1, 3), jnp.float32)
    w3_t = 0.1 * jax.random.normal(ks[3], (Ci, C1, 1), jnp.float32)

    g1, be1, m1, v1 = _bn_params(ks[4], C1)
    g2, be2, m2, v2 = _bn_params(ks[5], C1)
    g3, be3, m3, v3 = _bn_params(ks[6], Ci)

    params = (w1_t, g1, be1, m1, v1,
              w2_t, g2, be2, m2, v2,
              w3_t, g3, be3, m3, v3)

    out = resnet_block2_pallas(x_ncl, params)     # f32 compute (bf16 optional)
    out = jax.block_until_ready(out)

    ref = jax.block_until_ready(resnet_block2_ref(x_ncl, params))

    np.testing.assert_allclose(np.asarray(out), np.asarray(ref),
                               rtol=1e-4, atol=1e-4)
    print("KERNEL_OK")
</pallas_src>

<mosaic_0001>
module attributes {stable_mosaic.version = 11 : i64} {
  func.func @resnet_block2_kernel(%arg0: i32, %arg1: memref<128x128xf32, #tpu.memory_space<vmem>>, %arg2: memref<128x64xf32, #tpu.memory_space<vmem>>, %arg3: memref<192x64xf32, #tpu.memory_space<vmem>>, %arg4: memref<64x128xf32, #tpu.memory_space<vmem>>, %arg5: memref<1x64xf32, #tpu.memory_space<vmem>>, %arg6: memref<1x64xf32, #tpu.memory_space<vmem>>, %arg7: memref<1x128xf32, #tpu.memory_space<vmem>>, %arg8: memref<128x128xf32, #tpu.memory_space<vmem>>) attributes {dimension_semantics = [#tpu.dimension_semantics<parallel>], iteration_bounds = array<i64: 2>, scalar_prefetch = 0 : i64, scratch_operands = 0 : i64, tpu.core_type = #tpu.core_type<tc>, window_params = [{transform_indices = @transform_0, window_bounds = array<i64: 128, 128>}, {pipeline_mode = #tpu.pipeline_mode<synchronous>, transform_indices = @transform_1, window_bounds = array<i64: 128, 64>}, {pipeline_mode = #tpu.pipeline_mode<synchronous>, transform_indices = @transform_2, window_bounds = array<i64: 192, 64>}, {pipeline_mode = #tpu.pipeline_mode<synchronous>, transform_indices = @transform_3, window_bounds = array<i64: 64, 128>}, {pipeline_mode = #tpu.pipeline_mode<synchronous>, transform_indices = @transform_4, window_bounds = array<i64: 1, 64>}, {pipeline_mode = #tpu.pipeline_mode<synchronous>, transform_indices = @transform_5, window_bounds = array<i64: 1, 64>}, {pipeline_mode = #tpu.pipeline_mode<synchronous>, transform_indices = @transform_6, window_bounds = array<i64: 1, 128>}, {transform_indices = @transform_7, window_bounds = array<i64: 128, 128>}]} {
    %c0 = arith.constant 0 : index
    %c0_0 = arith.constant 0 : index
    %0 = vector.load %arg1[%c0, %c0_0] : memref<128x128xf32, #tpu.memory_space<vmem>>, vector<128x128xf32>
    %c0_1 = arith.constant 0 : index
    %c0_2 = arith.constant 0 : index
    %1 = vector.load %arg2[%c0_1, %c0_2] : memref<128x64xf32, #tpu.memory_space<vmem>>, vector<128x64xf32>
    %cst = arith.constant dense<0.000000e+00> : vector<128x64xf32>
    %2 = tpu.matmul %0, %1, %cst {dimension_numbers = #tpu.dot_dimension_numbers<[1], [0], [0], [1], [0, 0, 1, 1], [], []>} : vector<128x128xf32>, vector<128x64xf32>, vector<128x64xf32> -> vector<128x64xf32>
    %c0_3 = arith.constant 0 : index
    %c0_4 = arith.constant 0 : index
    %3 = vector.load %arg5[%c0_3, %c0_4] : memref<1x64xf32, #tpu.memory_space<vmem>>, vector<1x64xf32>
    %4 = vector.broadcast %3 : vector<1x64xf32> to vector<128x64xf32>
    %5 = arith.addf %2, %4 : vector<128x64xf32>
    %cst_5 = arith.constant 0.000000e+00 : f32
    %6 = vector.broadcast %cst_5 : f32 to vector<128x64xf32>
    %7 = arith.maximumf %5, %6 : vector<128x64xf32>
    %8 = tpu.iota {dimensions = array<i32: 0>} : vector<128x1xi32>
    %c64_i32 = arith.constant 64 : i32
    %c0_i32 = arith.constant 0 : i32
    %9 = arith.cmpi eq, %c64_i32, %c0_i32 : i32
    %c1_i32 = arith.constant 1 : i32
    %10 = arith.select %9, %c1_i32, %c64_i32 : i32
    %11 = vector.broadcast %10 : i32 to vector<128x1xi32>
    %12 = arith.remsi %8, %11 : vector<128x1xi32>
    %c0_i32_6 = arith.constant 0 : i32
    %13 = vector.broadcast %c0_i32_6 : i32 to vector<128x1xi32>
    %14 = arith.cmpi ne, %12, %13 : vector<128x1xi32>
    %c0_i32_7 = arith.constant 0 : i32
    %15 = vector.broadcast %c0_i32_7 : i32 to vector<128x1xi32>
    %16 = arith.cmpi slt, %12, %15 : vector<128x1xi32>
    %c0_i32_8 = arith.constant 0 : i32
    %17 = arith.cmpi slt, %10, %c0_i32_8 : i32
    %18 = vector.broadcast %17 : i1 to vector<128x1xi1>
    %19 = vector.broadcast %18 : vector<128x1xi1> to vector<128x1xi1>
    %20 = arith.xori %16, %19 : vector<128x1xi1>
    %21 = arith.andi %20, %14 : vector<128x1xi1>
    %22 = vector.broadcast %10 : i32 to vector<128x1xi32>
    %23 = arith.addi %12, %22 : vector<128x1xi32>
    %24 = arith.select %21, %23, %12 : vector<128x1xi1>, vector<128x1xi32>
    %cst_9 = arith.constant 0.000000e+00 : f32
    %25 = vector.broadcast %cst_9 : f32 to vector<1x64xf32>
    %c0_i32_10 = arith.constant 0 : i32
    %26 = vector.broadcast %c0_i32_10 : i32 to vector<128x1xi32>
    %27 = arith.cmpi ne, %24, %26 : vector<128x1xi32>
    %28 = vector.extract_strided_slice %7 {offsets = [0, 0], sizes = [127, 64], strides = [1, 1]} : vector<128x64xf32> to vector<127x64xf32>
    %29 = tpu.concatenate %25, %28 in 0 : vector<1x64xf32>, vector<127x64xf32> -> vector<128x64xf32>
    %cst_11 = arith.constant 0.000000e+00 : f32
    %30 = vector.shape_cast %27 : vector<128x1xi1> to vector<128x1xi1>
    %31 = vector.broadcast %30 : vector<128x1xi1> to vector<128x64xi1>
    %32 = vector.broadcast %cst_11 : f32 to vector<128x64xf32>
    %33 = arith.select %31, %29, %32 : vector<128x64xi1>, vector<128x64xf32>
    %c63_i32 = arith.constant 63 : i32
    %34 = vector.broadcast %c63_i32 : i32 to vector<128x1xi32>
    %35 = arith.cmpi ne, %24, %34 : vector<128x1xi32>
    %36 = vector.extract_strided_slice %7 {offsets = [1, 0], sizes = [127, 64], strides = [1, 1]} : vector<128x64xf32> to vector<127x64xf32>
    %37 = tpu.concatenate %36, %25 in 0 : vector<127x64xf32>, vector<1x64xf32> -> vector<128x64xf32>
    %cst_12 = arith.constant 0.000000e+00 : f32
    %38 = vector.shape_cast %35 : vector<128x1xi1> to vector<128x1xi1>
    %39 = vector.broadcast %38 : vector<128x1xi1> to vector<128x64xi1>
    %40 = vector.broadcast %cst_12 : f32 to vector<128x64xf32>
    %41 = arith.select %39, %37, %40 : vector<128x64xi1>, vector<128x64xf32>
    %42 = tpu.concatenate %33, %7, %41 in 1 : vector<128x64xf32>, vector<128x64xf32>, vector<128x64xf32> -> vector<128x192xf32>
    %c0_13 = arith.constant 0 : index
    %c0_14 = arith.constant 0 : index
    %43 = vector.load %arg3[%c0_13, %c0_14] : memref<192x64xf32, #tpu.memory_space<vmem>>, vector<192x64xf32>
    %cst_15 = arith.constant dense<0.000000e+00> : vector<128x64xf32>
    %44 = tpu.matmul %42, %43, %cst_15 {dimension_numbers = #tpu.dot_dimension_numbers<[1], [0], [0], [1], [0, 0, 1, 1], [], []>} : vector<128x192xf32>, vector<192x64xf32>, vector<128x64xf32> -> vector<128x64xf32>
    %c0_16 = arith.constant 0 : index
    %c0_17 = arith.constant 0 : index
    %45 = vector.load %arg6[%c0_16, %c0_17] : memref<1x64xf32, #tpu.memory_space<vmem>>, vector<1x64xf32>
    %46 = vector.broadcast %45 : vector<1x64xf32> to vector<128x64xf32>
    %47 = arith.addf %44, %46 : vector<128x64xf32>
    %cst_18 = arith.constant 0.000000e+00 : f32
    %48 = vector.broadcast %cst_18 : f32 to vector<128x64xf32>
    %49 = arith.maximumf %47, %48 : vector<128x64xf32>
    %c0_19 = arith.constant 0 : index
    %c0_20 = arith.constant 0 : index
    %50 = vector.load %arg4[%c0_19, %c0_20] : memref<64x128xf32, #tpu.memory_space<vmem>>, vector<64x128xf32>
    %cst_21 = arith.constant dense<0.000000e+00> : vector<128x128xf32>
    %51 = tpu.matmul %49, %50, %cst_21 {dimension_numbers = #tpu.dot_dimension_numbers<[1], [0], [0], [1], [0, 0, 1, 1], [], []>} : vector<128x64xf32>, vector<64x128xf32>, vector<128x128xf32> -> vector<128x128xf32>
    %c0_22 = arith.constant 0 : index
    %c0_23 = arith.constant 0 : index
    %52 = vector.load %arg7[%c0_22, %c0_23] : memref<1x128xf32, #tpu.memory_space<vmem>>, vector<1x128xf32>
    %53 = vector.broadcast %52 : vector<1x128xf32> to vector<128x128xf32>
    %54 = arith.addf %51, %53 : vector<128x128xf32>
    %55 = arith.addf %0, %54 : vector<128x128xf32>
    %cst_24 = arith.constant 0.000000e+00 : f32
    %56 = vector.broadcast %cst_24 : f32 to vector<128x128xf32>
    %57 = arith.maximumf %55, %56 : vector<128x128xf32>
    %c0_25 = arith.constant 0 : index
    %c0_26 = arith.constant 0 : index
    %58 = vector.load %arg8[%c0_25, %c0_26] : memref<128x128xf32, #tpu.memory_space<vmem>>, vector<128x128xf32>
    tpu.vector_store %arg8[%c0_25, %c0_26], %57 {strides = array<i32>} : memref<128x128xf32, #tpu.memory_space<vmem>>, vector<128x128xf32>,
    return
  }
  func.func @transform_0(%arg0: i32) -> (i32, i32) {
    %c0_i32 = arith.constant 0 : i32
    %c0_i32_0 = arith.constant 0 : i32
    return %arg0, %c0_i32 : i32, i32
  }
  func.func @transform_1(%arg0: i32) -> (i32, i32) {
    %c0_i32 = arith.constant 0 : i32
    %c0_i32_0 = arith.constant 0 : i32
    %c0_i32_1 = arith.constant 0 : i32
    return %c0_i32, %c0_i32_0 : i32, i32
  }
  func.func @transform_2(%arg0: i32) -> (i32, i32) {
    %c0_i32 = arith.constant 0 : i32
    %c0_i32_0 = arith.constant 0 : i32
    %c0_i32_1 = arith.constant 0 : i32
    return %c0_i32, %c0_i32_0 : i32, i32
  }
  func.func @transform_3(%arg0: i32) -> (i32, i32) {
    %c0_i32 = arith.constant 0 : i32
    %c0_i32_0 = arith.constant 0 : i32
    %c0_i32_1 = arith.constant 0 : i32
    return %c0_i32, %c0_i32_0 : i32, i32
  }
  func.func @transform_4(%arg0: i32) -> (i32, i32) {
    %c0_i32 = arith.constant 0 : i32
    %c0_i32_0 = arith.constant 0 : i32
    %c0_i32_1 = arith.constant 0 : i32
    return %c0_i32, %c0_i32_0 : i32, i32
  }
  func.func @transform_5(%arg0: i32) -> (i32, i32) {
    %c0_i32 = arith.constant 0 : i32
    %c0_i32_0 = arith.constant 0 : i32
    %c0_i32_1 = arith.constant 0 : i32
    return %c0_i32, %c0_i32_0 : i32, i32
  }
  func.func @transform_6(%arg0: i32) -> (i32, i32) {
    %c0_i32 = arith.constant 0 : i32
    %c0_i32_0 = arith.constant 0 : i32
    %c0_i32_1 = arith.constant 0 : i32
    return %c0_i32, %c0_i32_0 : i32, i32
  }
  func.func @transform_7(%arg0: i32) -> (i32, i32) {
    %c0_i32 = arith.constant 0 : i32
    %c0_i32_0 = arith.constant 0 : i32
    return %arg0, %c0_i32 : i32, i32
  }
}

</mosaic_0001>

<llo_original>
// kernel: tpu_custom_call.1
$region0: #{tpu_custom_call.1}
  #allocation0 [shape = 'u32[]', space=smem, size = 0x4, offset = 0x4, fixed_abs, tag = 'smem constant byte address 0x4 - core index']
  #allocation1 [shape = 'u32[72,128]{1,0:T(1,128)}', space=vmem, size = 0x9000, scoped, tag = 'internal scratch']
  %s0 = inlined_call_operand.vmem [shape: f32[256,128], index: 0, kind: input, shape index: {}]
  %s1 = inlined_call_operand.vmem [shape: f32[128,64], index: 1, kind: input, shape index: {}]
  %s2 = inlined_call_operand.vmem [shape: f32[192,64], index: 2, kind: input, shape index: {}]
  %s3 = inlined_call_operand.vmem [shape: f32[64,128], index: 3, kind: input, shape index: {}]
  %s4 = inlined_call_operand.vmem [shape: f32[1,64], index: 4, kind: input, shape index: {}]
  %s5 = inlined_call_operand.vmem [shape: f32[1,64], index: 5, kind: input, shape index: {}]
  %s6 = inlined_call_operand.vmem [shape: f32[1,128], index: 6, kind: input, shape index: {}]
  %s7 = inlined_call_operand.hbm [shape: f32[256,128], index: 7, kind: output, shape index: {}]
  %s8 = sld [smem:[#allocation0]]
  $region61: #{tpu_custom_call.1} parent=0
    _
  %s10 = ssub.s32 1, %s8
  %s11 = scalar_select 0, %s10, %s8
  $region1: #{tpu_custom_call.1} parent=0
    #allocation2 [shape = 'u8[131072]{0}', space=vmem, size = 0x20000, scoped, tag = 'output window, operand 0']
    #allocation3 [shape = 's32[2]{0}', space=sflag, size = 0x8, scoped, tag = 'scoped memory for tpu_custom_call.1']
    %12 = vsyncpa [#allocation3], 0
    %s13 = scalar_lea.sflag [#allocation3], 1
    %14 = vsyncpa %s13, 0
    loop: start=0, step=1, limit=4
    $region2: #{tpu_custom_call.1} parent=1 // loop_pre_header
      _
    $region3: #{tpu_custom_call.1} parent=1 // loop_header
      %s16 = sphi 0, %s20
      %p17 = scmp.ge.s32.totalorder %s16, 4
      %s26 = sphi 0, %s28
      %s29 = sphi 0, %s26
      %s30 = sphi 0, %s29
      %s46 = sphi 0, %s30
      %s50 = sphi 0, %s50
      %s52 = sphi 0, %s50
      %s53 = sphi 0, %s52
      %s67 = sphi 0, %s53
      %s71 = sphi 0, %s71
      %s73 = sphi 0, %s71
      %s74 = sphi 0, %s73
      %s88 = sphi 0, %s74
      %s92 = sphi 0, %s92
      %s94 = sphi 0, %s92
      %s95 = sphi 0, %s94
      %s109 = sphi 0, %s95
      %s113 = sphi 0, %s113
      %s115 = sphi 0, %s113
      %s116 = sphi 0, %s115
      %s130 = sphi 0, %s116
      %s134 = sphi 0, %s134
      %s136 = sphi 0, %s134
      %s137 = sphi 0, %s136
      %s151 = sphi 0, %s137
      %s155 = sphi 0, %s155
      %s157 = sphi 0, %s155
      %s158 = sphi 0, %s157
      %s172 = sphi 0, %s158
      %s178 = sphi 0, %s180
      %s181 = sphi 0, %s178
      %s182 = sphi 0, %s181
      %s198 = sphi 0, %s182
    $region4: #{tpu_custom_call.1} parent=1 // loop_header_branch
      %19 = sbr.rel (%p17) target = $region8
    $region5: #{tpu_custom_call.1} parent=1 // loop_body
      %s21 = ssub.s32 %s16, 1
      %s22 = ssub.s32 %s16, 2
      %s23 = sadd.s32 %s16, 1
      %s24 = ssub.s32 %s16, %s23
      %p25 = scmp.eq.s32.totalorder %s24, 0
      %s27 = sadd.s32 %s26, 1
      %s28 = scalar_select %p25, %s26, %s27
      %p31 = pneg %p25
      %p32 = scmp.eq.s32.totalorder %s16, 1
      %p33 = por %p31, %p32
      %p34 = scmp.ne.s32.totalorder %s26, %s29
      %p35 = scmp.eq.s32.totalorder %s16, 0
      %p36 = por %p34, %p35
      %p37 = scmp.ne.s32.totalorder %s26, %s29
      %p38 = scmp.eq.s32.totalorder %s21, 1
      %p39 = por %p37, %p38
      %p40 = scmp.ne.s32.totalorder %s29, %s30
      %p41 = scmp.eq.s32.totalorder %s21, 0
      %p42 = por %p40, %p41
      %p43 = scmp.ne.s32.totalorder %s29, %s30
      %p44 = scmp.eq.s32.totalorder %s22, 1
      %p45 = por %p43, %p44
      %p47 = scmp.ne.s32.totalorder %s30, %s46
      %p48 = scmp.eq.s32.totalorder %s22, 0
      %p49 = por %p47, %p48
      %s51 = sadd.s32 %s50, 1
      %p54 = scmp.eq.s32.totalorder %s16, 1
      %p55 = scmp.ne.s32.totalorder %s50, %s52
      %p56 = scmp.eq.s32.totalorder %s16, 0
      %p57 = por %p55, %p56
      %p58 = scmp.ne.s32.totalorder %s50, %s52
      %p59 = scmp.eq.s32.totalorder %s21, 1
      %p60 = por %p58, %p59
      %p61 = scmp.ne.s32.totalorder %s52, %s53
      %p62 = scmp.eq.s32.totalorder %s21, 0
      %p63 = por %p61, %p62
      %p64 = scmp.ne.s32.totalorder %s52, %s53
      %p65 = scmp.eq.s32.totalorder %s22, 1
      %p66 = por %p64, %p65
      %p68 = scmp.ne.s32.totalorder %s53, %s67
      %p69 = scmp.eq.s32.totalorder %s22, 0
      %p70 = por %p68, %p69
      %s72 = sadd.s32 %s71, 1
      %p75 = scmp.eq.s32.totalorder %s16, 1
      %p76 = scmp.ne.s32.totalorder %s71, %s73
      %p77 = scmp.eq.s32.totalorder %s16, 0
      %p78 = por %p76, %p77
      %p79 = scmp.ne.s32.totalorder %s71, %s73
      %p80 = scmp.eq.s32.totalorder %s21, 1
      %p81 = por %p79, %p80
      %p82 = scmp.ne.s32.totalorder %s73, %s74
      %p83 = scmp.eq.s32.totalorder %s21, 0
      %p84 = por %p82, %p83
      %p85 = scmp.ne.s32.totalorder %s73, %s74
      %p86 = scmp.eq.s32.totalorder %s22, 1
      %p87 = por %p85, %p86
      %p89 = scmp.ne.s32.totalorder %s74, %s88
      %p90 = scmp.eq.s32.totalorder %s22, 0
      %p91 = por %p89, %p90
      %s93 = sadd.s32 %s92, 1
      %p96 = scmp.eq.s32.totalorder %s16, 1
      %p97 = scmp.ne.s32.totalorder %s92, %s94
      %p98 = scmp.eq.s32.totalorder %s16, 0
      %p99 = por %p97, %p98
      %p100 = scmp.ne.s32.totalorder %s92, %s94
      %p101 = scmp.eq.s32.totalorder %s21, 1
      %p102 = por %p100, %p101
      %p103 = scmp.ne.s32.totalorder %s94, %s95
      %p104 = scmp.eq.s32.totalorder %s21, 0
      %p105 = por %p103, %p104
      %p106 = scmp.ne.s32.totalorder %s94, %s95
      %p107 = scmp.eq.s32.totalorder %s22, 1
      %p108 = por %p106, %p107
      %p110 = scmp.ne.s32.totalorder %s95, %s109
      %p111 = scmp.eq.s32.totalorder %s22, 0
      %p112 = por %p110, %p111
      %s114 = sadd.s32 %s113, 1
      %p117 = scmp.eq.s32.totalorder %s16, 1
      %p118 = scmp.ne.s32.totalorder %s113, %s115
      %p119 = scmp.eq.s32.totalorder %s16, 0
      %p120 = por %p118, %p119
      %p121 = scmp.ne.s32.totalorder %s113, %s115
      %p122 = scmp.eq.s32.totalorder %s21, 1
      %p123 = por %p121, %p122
      %p124 = scmp.ne.s32.totalorder %s115, %s116
      %p125 = scmp.eq.s32.totalorder %s21, 0
      %p126 = por %p124, %p125
      %p127 = scmp.ne.s32.totalorder %s115, %s116
      %p128 = scmp.eq.s32.totalorder %s22, 1
      %p129 = por %p127, %p128
      %p131 = scmp.ne.s32.totalorder %s116, %s130
      %p132 = scmp.eq.s32.totalorder %s22, 0
      %p133 = por %p131, %p132
      %s135 = sadd.s32 %s134, 1
      %p138 = scmp.eq.s32.totalorder %s16, 1
      %p139 = scmp.ne.s32.totalorder %s134, %s136
      %p140 = scmp.eq.s32.totalorder %s16, 0
      %p141 = por %p139, %p140
      %p142 = scmp.ne.s32.totalorder %s134, %s136
      %p143 = scmp.eq.s32.totalorder %s21, 1
      %p144 = por %p142, %p143
      %p145 = scmp.ne.s32.totalorder %s136, %s137
      %p146 = scmp.eq.s32.totalorder %s21, 0
      %p147 = por %p145, %p146
      %p148 = scmp.ne.s32.totalorder %s136, %s137
      %p149 = scmp.eq.s32.totalorder %s22, 1
      %p150 = por %p148, %p149
      %p152 = scmp.ne.s32.totalorder %s137, %s151
      %p153 = scmp.eq.s32.totalorder %s22, 0
      %p154 = por %p152, %p153
      %s156 = sadd.s32 %s155, 1
      %p159 = scmp.eq.s32.totalorder %s16, 1
      %p160 = scmp.ne.s32.totalorder %s155, %s157
      %p161 = scmp.eq.s32.totalorder %s16, 0
      %p162 = por %p160, %p161
      %p163 = scmp.ne.s32.totalorder %s155, %s157
      %p164 = scmp.eq.s32.totalorder %s21, 1
      %p165 = por %p163, %p164
      %p166 = scmp.ne.s32.totalorder %s157, %s158
      %p167 = scmp.eq.s32.totalorder %s21, 0
      %p168 = por %p166, %p167
      %p169 = scmp.ne.s32.totalorder %s157, %s158
      %p170 = scmp.eq.s32.totalorder %s22, 1
      %p171 = por %p169, %p170
      %p173 = scmp.ne.s32.totalorder %s158, %s172
      %p174 = scmp.eq.s32.totalorder %s22, 0
      %p175 = por %p173, %p174
      %s176 = ssub.s32 %s16, %s23
      %p177 = scmp.eq.s32.totalorder %s176, 0
      %s179 = sadd.s32 %s178, 1
      %s180 = scalar_select %p177, %s178, %s179
      %p183 = pneg %p177
      %p184 = scmp.eq.s32.totalorder %s16, 1
      %p185 = por %p183, %p184
      %p186 = scmp.ne.s32.totalorder %s178, %s181
      %p187 = scmp.eq.s32.totalorder %s16, 0
      %p188 = por %p186, %p187
      %p189 = scmp.ne.s32.totalorder %s178, %s181
      %p190 = scmp.eq.s32.totalorder %s21, 1
      %p191 = por %p189, %p190
      %p192 = scmp.ne.s32.totalorder %s181, %s182
      %p193 = scmp.eq.s32.totalorder %s21, 0
      %p194 = por %p192, %p193
      %p195 = scmp.ne.s32.totalorder %s181, %s182
      %p196 = scmp.eq.s32.totalorder %s22, 1
      %p197 = por %p195, %p196
      %p199 = scmp.ne.s32.totalorder %s182, %s198
      %p200 = scmp.eq.s32.totalorder %s22, 0
      %p201 = por %p199, %p200
      %p202 = scmp.le.s32.totalorder 1, %s16
      %p203 = scmp.lt.s32.totalorder %s16, 3
      %p204 = pnand %p202, %p203
      %p205 = pneg %p204
      // Predicated region
      $region9: #{tpu_custom_call.1} parent=5 // pred_check
        _
      $region10: #{tpu_custom_call.1} parent=5 // pred_check_branch
        %207 = sbr.rel (%p204) target = $region12
      $region11: #{tpu_custom_call.1} parent=5 // pred_region
        %s208 = ssub.s32 %s16, 1
        // Predicated region
        $region13: #{tpu_custom_call.1} parent=11 // pred_check
          %p209 = pneg %p63
        $region14: #{tpu_custom_call.1} parent=11 // pred_check_branch
          %211 = sbr.rel (%p209) target = $region16
        $region15: #{tpu_custom_call.1} parent=11 // pred_region
          _
        $region16: #{tpu_custom_call.1} parent=11 // pred_fallthru
          _
        // Predicated region
        $region17: #{tpu_custom_call.1} parent=11 // pred_check
          %p212 = pneg %p84
        $region18: #{tpu_custom_call.1} parent=11 // pred_check_branch
          %214 = sbr.rel (%p212) target = $region20
        $region19: #{tpu_custom_call.1} parent=11 // pred_region
          _
        $region20: #{tpu_custom_call.1} parent=11 // pred_fallthru
          _
        // Predicated region
        $region21: #{tpu_custom_call.1} parent=11 // pred_check
          %p215 = pneg %p105
        $region22: #{tpu_custom_call.1} parent=11 // pred_check_branch
          %217 = sbr.rel (%p215) target = $region24
        $region23: #{tpu_custom_call.1} parent=11 // pred_region
          _
        $region24: #{tpu_custom_call.1} parent=11 // pred_fallthru
          _
        // Predicated region
        $region25: #{tpu_custom_call.1} parent=11 // pred_check
          %p218 = pneg %p126
        $region26: #{tpu_custom_call.1} parent=11 // pred_check_branch
          %220 = sbr.rel (%p218) target = $region28
        $region27: #{tpu_custom_call.1} parent=11 // pred_region
          _
        $region28: #{tpu_custom_call.1} parent=11 // pred_fallthru
          _
        // Predicated region
        $region29: #{tpu_custom_call.1} parent=11 // pred_check
          %p221 = pneg %p147
        $region30: #{tpu_custom_call.1} parent=11 // pred_check_branch
          %223 = sbr.rel (%p221) target = $region32
        $region31: #{tpu_custom_call.1} parent=11 // pred_region
          _
        $region32: #{tpu_custom_call.1} parent=11 // pred_fallthru
          _
        // Predicated region
        $region33: #{tpu_custom_call.1} parent=11 // pred_check
          %p224 = pneg %p168
        $region34: #{tpu_custom_call.1} parent=11 // pred_check_branch
          %226 = sbr.rel (%p224) target = $region36
        $region35: #{tpu_custom_call.1} parent=11 // pred_region
          _
        $region36: #{tpu_custom_call.1} parent=11 // pred_fallthru
          _
      $region12: #{tpu_custom_call.1} parent=5 // pred_fallthru
        _
      %p227 = scmp.lt.s32.totalorder %s16, 2
      // Predicated region
      $region37: #{tpu_custom_call.1} parent=5 // pred_check
        %p228 = pneg %p227
      $region38: #{tpu_custom_call.1} parent=5 // pred_check_branch
        %230 = sbr.rel (%p228) target = $region40
      $region39: #{tpu_custom_call.1} parent=5 // pred_region
        // Predicated region
        $region41: #{tpu_custom_call.1} parent=39 // pred_check
          %p231 = pneg %p36
        $region42: #{tpu_custom_call.1} parent=39 // pred_check_branch
          %233 = sbr.rel (%p231) target = $region44
        $region43: #{tpu_custom_call.1} parent=39 // pred_region
          %s234 = smul.u32 16, %s16
          %p235 = scmp.lt.s32.totalorder %s234, 31
          %s236 = scalar_select %p235, %s234, 31
          %s237 = smul.addr %s236, 8
          %s238 = scalar_lea.vmem %s0, %s237
          %s239 = smul.u32 16, %s16
        $region44: #{tpu_custom_call.1} parent=39 // pred_fallthru
          _
      $region40: #{tpu_custom_call.1} parent=5 // pred_fallthru
        _
      %p240 = scmp.le.s32.totalorder 1, %s16
      %p241 = scmp.lt.s32.totalorder %s16, 3
      %p242 = pnand %p240, %p241
      %p243 = pneg %p242
      // Predicated region
      $region45: #{tpu_custom_call.1} parent=5 // pred_check
        _
      $region46: #{tpu_custom_call.1} parent=5 // pred_check_branch
        %245 = sbr.rel (%p242) target = $region48
      $region47: #{tpu_custom_call.1} parent=5 // pred_region
        %s246 = ssub.s32 %s16, 1
        %s247 = smul.u32 16, %s21
        %p248 = scmp.lt.s32.totalorder %s247, 31
        %s249 = scalar_select %p248, %s247, 31
        %s250 = smul.addr %s249, 8
        %s251 = scalar_lea.vmem %s0, %s250
        %p252 = pneg %p42
        %p253 = pneg %p39
        %p254 = pneg %p63
        %p255 = pneg %p60
        %p256 = pneg %p84
        %p257 = pneg %p81
        %p258 = pneg %p105
        %p259 = pneg %p102
        %p260 = pneg %p126
        %p261 = pneg %p123
        %p262 = pneg %p147
        %p263 = pneg %p144
        %p264 = pneg %p168
        %p265 = pneg %p165
        %p266 = pneg %p194
        %p267 = pneg %p191
        %s268 = sand.u32 %s181, 1
        %s269 = scalar_lea.sflag [#allocation3], %s268
        %s270 = sand.u32 %s181, 1
        %s271 = smul.addr %s270, 128
        %s272 = scalar_lea.vmem [#allocation2], %s271
        %s273 = smul.u32 16, %s21
        %p274 = scmp.lt.s32.totalorder %s273, 31
        %s275 = scalar_select %p274, %s273, 31
        %s276 = smul.addr %s275, 8
        %s277 = scalar_lea.vmem %s0, %s276
        %s278 = smul.u32 16, %s21
        %s279 = smul.u32 16, %s21
        %v280 = vld [vmem:[%s277] sm:$0xff]
        %v281 = vld [vmem:[%s277 + $0x8] sm:$0xff]
        %v282 = vld [vmem:[%s277 + $0x10] sm:$0xff]
        %v283 = vld [vmem:[%s277 + $0x18] sm:$0xff]
        %v284 = vld [vmem:[%s277 + $0x20] sm:$0xff]
        %v285 = vld [vmem:[%s277 + $0x28] sm:$0xff]
        %v286 = vld [vmem:[%s277 + $0x30] sm:$0xff]
        %v287 = vld [vmem:[%s277 + $0x38] sm:$0xff]
        %v288 = vld [vmem:[%s277 + $0x40] sm:$0xff]
        %v289 = vld [vmem:[%s277 + $0x48] sm:$0xff]
        %v290 = vld [vmem:[%s277 + $0x50] sm:$0xff]
        %v291 = vld [vmem:[%s277 + $0x58] sm:$0xff]
        %v292 = vld [vmem:[%s277 + $0x60] sm:$0xff]
        %v293 = vld [vmem:[%s277 + $0x68] sm:$0xff]
        %v294 = vld [vmem:[%s277 + $0x70] sm:$0xff]
        %v295 = vld [vmem:[%s277 + $0x78] sm:$0xff]
        %v296 = vld [vmem:[%s1] sm:$0xff]
        %v297 = vld [vmem:[%s1 + $0x8] sm:$0xff]
        %v298 = vld [vmem:[%s1 + $0x10] sm:$0xff]
        %v299 = vld [vmem:[%s1 + $0x18] sm:$0xff]
        %v300 = vld [vmem:[%s1 + $0x20] sm:$0xff]
        %v301 = vld [vmem:[%s1 + $0x28] sm:$0xff]
        %v302 = vld [vmem:[%s1 + $0x30] sm:$0xff]
        %v303 = vld [vmem:[%s1 + $0x38] sm:$0xff]
        %v304 = vld [vmem:[%s1 + $0x40] sm:$0xff]
        %v305 = vld [vmem:[%s1 + $0x48] sm:$0xff]
        %v306 = vld [vmem:[%s1 + $0x50] sm:$0xff]
        %v307 = vld [vmem:[%s1 + $0x58] sm:$0xff]
        %v308 = vld [vmem:[%s1 + $0x60] sm:$0xff]
        %v309 = vld [vmem:[%s1 + $0x68] sm:$0xff]
        %v310 = vld [vmem:[%s1 + $0x70] sm:$0xff]
        %v311 = vld [vmem:[%s1 + $0x78] sm:$0xff]
        %v312 = vld [vmem:[%s4] sm:$0x1]
        %v314 = vperm.slane %v312, 0
        %316 = vmatpush.msra.mxu0 %v311
        %317 = vmatpush.msra.mxu0 %v310
        %318 = vmatpush.msra.mxu0 %v309
        %319 = vmatpush.msra.mxu0 %v308
        %320 = vmatpush.msra.mxu0 %v307
        %321 = vmatpush.msra.mxu0 %v306
        %322 = vmatpush.msra.mxu0 %v305
        %323 = vmatpush.msra.mxu0 %v304
        %324 = vmatpush.msra.mxu0 %v303
        %325 = vmatpush.msra.mxu0 %v302
        %326 = vmatpush.msra.mxu0 %v301
        %327 = vmatpush.msra.mxu0 %v300
        %328 = vmatpush.msra.mxu0 %v299
        %329 = vmatpush.msra.mxu0 %v298
        %330 = vmatpush.msra.mxu0 %v297
        %331 = vmatpush.msra.mxu0 %v296
        %332 = vmatmul.f32.gmra.mxu0 %v280
        %v333 = vpop.f32.mrf.mxu0
        %v334 = vadd.f32 %v314, %v333
        %335 = vmatmul.f32.gmra.mxu0 %v281
        %v336 = vpop.f32.mrf.mxu0
        %v337 = vadd.f32 %v314, %v336
        %338 = vmatmul.f32.gmra.mxu0 %v282
        %v339 = vpop.f32.mrf.mxu0
        %v340 = vadd.f32 %v314, %v339
        %341 = vmatmul.f32.gmra.mxu0 %v283
        %v342 = vpop.f32.mrf.mxu0
        %v343 = vadd.f32 %v314, %v342
        %344 = vmatmul.f32.gmra.mxu0 %v284
        %v345 = vpop.f32.mrf.mxu0
        %v346 = vadd.f32 %v314, %v345
        %347 = vmatmul.f32.gmra.mxu0 %v285
        %v348 = vpop.f32.mrf.mxu0
        %v349 = vadd.f32 %v314, %v348
        %350 = vmatmul.f32.gmra.mxu0 %v286
        %v351 = vpop.f32.mrf.mxu0
        %v352 = vadd.f32 %v314, %v351
        %353 = vmatmul.f32.gmra.mxu0 %v287
        %v354 = vpop.f32.mrf.mxu0
        %v355 = vadd.f32 %v314, %v354
        %356 = vmatmul.f32.gmra.mxu0 %v288
        %v357 = vpop.f32.mrf.mxu0
        %v358 = vadd.f32 %v314, %v357
        %359 = vmatmul.f32.gmra.mxu0 %v289
        %v360 = vpop.f32.mrf.mxu0
        %v361 = vadd.f32 %v314, %v360
        %362 = vmatmul.f32.gmra.mxu0 %v290
        %v363 = vpop.f32.mrf.mxu0
        %v364 = vadd.f32 %v314, %v363
        %365 = vmatmul.f32.gmra.mxu0 %v291
        %v366 = vpop.f32.mrf.mxu0
        %v367 = vadd.f32 %v314, %v366
        %368 = vmatmul.f32.gmra.mxu0 %v292
        %v369 = vpop.f32.mrf.mxu0
        %v370 = vadd.f32 %v314, %v369
        %371 = vmatmul.f32.gmra.mxu0 %v293
        %v372 = vpop.f32.mrf.mxu0
        %v373 = vadd.f32 %v314, %v372
        %374 = vmatmul.f32.gmra.mxu0 %v294
        %v375 = vpop.f32.mrf.mxu0
        %v376 = vadd.f32 %v314, %v375
        %377 = vmatmul.f32.gmra.mxu0 %v295
        %v378 = vpop.f32.mrf.mxu0
        %v379 = vadd.f32 %v314, %v378
        %380 = vdwg.mxu0
        %v381 = vmax.f32 %v334, 0.0
        %v382 = vmax.f32 %v337, 0.0
        %v383 = vmax.f32 %v340, 0.0
        %v384 = vmax.f32 %v343, 0.0
        %v385 = vmax.f32 %v346, 0.0
        %v386 = vmax.f32 %v349, 0.0
        %v387 = vmax.f32 %v352, 0.0
        %v388 = vmax.f32 %v355, 0.0
        %v389 = vmax.f32 %v358, 0.0
        %v390 = vmax.f32 %v361, 0.0
        %v391 = vmax.f32 %v364, 0.0
        %v392 = vmax.f32 %v367, 0.0
        %v393 = vmax.f32 %v370, 0.0
        %v394 = vmax.f32 %v373, 0.0
        %v395 = vmax.f32 %v376, 0.0
        %v396 = vmax.f32 %v379, 0.0
        %v397 = vlaneseq
        %v398 = vshrl.u32 %v397, 7
        %v399 = vadd.s32 %v398, 8
        %v400 = vadd.s32 %v398, 16
        %v401 = vadd.s32 %v398, 24
        %v402 = vadd.s32 %v398, 32
        %v403 = vadd.s32 %v398, 40
        %v404 = vadd.s32 %v398, 48
        %v405 = vadd.s32 %v398, 56
        %v406 = vadd.s32 %v398, 64
        %v407 = vadd.s32 %v398, 72
        %v408 = vadd.s32 %v398, 80
        %v409 = vadd.s32 %v398, 88
        %v410 = vadd.s32 %v398, 96
        %v411 = vadd.s32 %v398, 104
        %v412 = vadd.s32 %v398, 112
        %v413 = vadd.s32 %v398, 120
        %vm414 = vcmp.lt.s32.totalorder %v398, 0
        %v415 = vsub.s32 0, %v398
        %v416 = vsel %vm414, %v415, %v398
        %v417 = vshrl.u32 %v416, 6
        %v418 = vand.u32 %v416, 63
        %v419 = vsub.s32 0, %v418
        %v420 = vsel %vm414, %v419, %v418
        %vm421 = vcmp.lt.s32.totalorder %v399, 0
        %v422 = vsub.s32 0, %v399
        %v423 = vsel %vm421, %v422, %v399
        %v424 = vshrl.u32 %v423, 6
        %v425 = vand.u32 %v423, 63
        %v426 = vsub.s32 0, %v425
        %v427 = vsel %vm421, %v426, %v425
        %vm428 = vcmp.lt.s32.totalorder %v400, 0
        %v429 = vsub.s32 0, %v400
        %v430 = vsel %vm428, %v429, %v400
        %v431 = vshrl.u32 %v430, 6
        %v432 = vand.u32 %v430, 63
        %v433 = vsub.s32 0, %v432
        %v434 = vsel %vm428, %v433, %v432
        %vm435 = vcmp.lt.s32.totalorder %v401, 0
        %v436 = vsub.s32 0, %v401
        %v437 = vsel %vm435, %v436, %v401
        %v438 = vshrl.u32 %v437, 6
        %v439 = vand.u32 %v437, 63
        %v440 = vsub.s32 0, %v439
        %v441 = vsel %vm435, %v440, %v439
        %vm442 = vcmp.lt.s32.totalorder %v402, 0
        %v443 = vsub.s32 0, %v402
        %v444 = vsel %vm442, %v443, %v402
        %v445 = vshrl.u32 %v444, 6
        %v446 = vand.u32 %v444, 63
        %v447 = vsub.s32 0, %v446
        %v448 = vsel %vm442, %v447, %v446
        %vm449 = vcmp.lt.s32.totalorder %v403, 0
        %v450 = vsub.s32 0, %v403
        %v451 = vsel %vm449, %v450, %v403
        %v452 = vshrl.u32 %v451, 6
        %v453 = vand.u32 %v451, 63
        %v454 = vsub.s32 0, %v453
        %v455 = vsel %vm449, %v454, %v453
        %vm456 = vcmp.lt.s32.totalorder %v404, 0
        %v457 = vsub.s32 0, %v404
        %v458 = vsel %vm456, %v457, %v404
        %v459 = vshrl.u32 %v458, 6
        %v460 = vand.u32 %v458, 63
        %v461 = vsub.s32 0, %v460
        %v462 = vsel %vm456, %v461, %v460
        %vm463 = vcmp.lt.s32.totalorder %v405, 0
        %v464 = vsub.s32 0, %v405
        %v465 = vsel %vm463, %v464, %v405
        %v466 = vshrl.u32 %v465, 6
        %v467 = vand.u32 %v465, 63
        %v468 = vsub.s32 0, %v467
        %v469 = vsel %vm463, %v468, %v467
        %vm470 = vcmp.lt.s32.totalorder %v406, 0
        %v471 = vsub.s32 0, %v406
        %v472 = vsel %vm470, %v471, %v406
        %v473 = vshrl.u32 %v472, 6
        %v474 = vand.u32 %v472, 63
        %v475 = vsub.s32 0, %v474
        %v476 = vsel %vm470, %v475, %v474
        %vm477 = vcmp.lt.s32.totalorder %v407, 0
        %v478 = vsub.s32 0, %v407
        %v479 = vsel %vm477, %v478, %v407
        %v480 = vshrl.u32 %v479, 6
        %v481 = vand.u32 %v479, 63
        %v482 = vsub.s32 0, %v481
        %v483 = vsel %vm477, %v482, %v481
        %vm484 = vcmp.lt.s32.totalorder %v408, 0
        %v485 = vsub.s32 0, %v408
        %v486 = vsel %vm484, %v485, %v408
        %v487 = vshrl.u32 %v486, 6
        %v488 = vand.u32 %v486, 63
        %v489 = vsub.s32 0, %v488
        %v490 = vsel %vm484, %v489, %v488
        %vm491 = vcmp.lt.s32.totalorder %v409, 0
        %v492 = vsub.s32 0, %v409
        %v493 = vsel %vm491, %v492, %v409
        %v494 = vshrl.u32 %v493, 6
        %v495 = vand.u32 %v493, 63
        %v496 = vsub.s32 0, %v495
        %v497 = vsel %vm491, %v496, %v495
        %vm498 = vcmp.lt.s32.totalorder %v410, 0
        %v499 = vsub.s32 0, %v410
        %v500 = vsel %vm498, %v499, %v410
        %v501 = vshrl.u32 %v500, 6
        %v502 = vand.u32 %v500, 63
        %v503 = vsub.s32 0, %v502
        %v504 = vsel %vm498, %v503, %v502
        %vm505 = vcmp.lt.s32.totalorder %v411, 0
        %v506 = vsub.s32 0, %v411
        %v507 = vsel %vm505, %v506, %v411
        %v508 = vshrl.u32 %v507, 6
        %v509 = vand.u32 %v507, 63
        %v510 = vsub.s32 0, %v509
        %v511 = vsel %vm505, %v510, %v509
        %vm512 = vcmp.lt.s32.totalorder %v412, 0
        %v513 = vsub.s32 0, %v412
        %v514 = vsel %vm512, %v513, %v412
        %v515 = vshrl.u32 %v514, 6
        %v516 = vand.u32 %v514, 63
        %v517 = vsub.s32 0, %v516
        %v518 = vsel %vm512, %v517, %v516
        %vm519 = vcmp.lt.s32.totalorder %v413, 0
        %v520 = vsub.s32 0, %v413
        %v521 = vsel %vm519, %v520, %v413
        %v522 = vshrl.u32 %v521, 6
        %v523 = vand.u32 %v521, 63
        %v524 = vsub.s32 0, %v523
        %v525 = vsel %vm519, %v524, %v523
        %vm526 = vcmp.ne.s32.totalorder %v420, 0
        %vm527 = vcmp.ne.s32.totalorder %v427, 0
        %vm528 = vcmp.ne.s32.totalorder %v434, 0
        %vm529 = vcmp.ne.s32.totalorder %v441, 0
        %vm530 = vcmp.ne.s32.totalorder %v448, 0
        %vm531 = vcmp.ne.s32.totalorder %v455, 0
        %vm532 = vcmp.ne.s32.totalorder %v462, 0
        %vm533 = vcmp.ne.s32.totalorder %v469, 0
        %vm534 = vcmp.ne.s32.totalorder %v476, 0
        %vm535 = vcmp.ne.s32.totalorder %v483, 0
        %vm536 = vcmp.ne.s32.totalorder %v490, 0
        %vm537 = vcmp.ne.s32.totalorder %v497, 0
        %vm538 = vcmp.ne.s32.totalorder %v504, 0
        %vm539 = vcmp.ne.s32.totalorder %v511, 0
        %vm540 = vcmp.ne.s32.totalorder %v518, 0
        %vm541 = vcmp.ne.s32.totalorder %v525, 0
        %vm542 = vcmp.lt.s32.totalorder %v420, 0
        %vm543 = vcmp.lt.s32.totalorder %v427, 0
        %vm544 = vcmp.lt.s32.totalorder %v434, 0
        %vm545 = vcmp.lt.s32.totalorder %v441, 0
        %vm546 = vcmp.lt.s32.totalorder %v448, 0
        %vm547 = vcmp.lt.s32.totalorder %v455, 0
        %vm548 = vcmp.lt.s32.totalorder %v462, 0
        %vm549 = vcmp.lt.s32.totalorder %v469, 0
        %vm550 = vcmp.lt.s32.totalorder %v476, 0
        %vm551 = vcmp.lt.s32.totalorder %v483, 0
        %vm552 = vcmp.lt.s32.totalorder %v490, 0
        %vm553 = vcmp.lt.s32.totalorder %v497, 0
        %vm554 = vcmp.lt.s32.totalorder %v504, 0
        %vm555 = vcmp.lt.s32.totalorder %v511, 0
        %vm556 = vcmp.lt.s32.totalorder %v518, 0
        %vm557 = vcmp.lt.s32.totalorder %v525, 0
        %vm558 = vmand %vm542, %vm526
        %vm559 = vmand %vm543, %vm527
        %vm560 = vmand %vm544, %vm528
        %vm561 = vmand %vm545, %vm529
        %vm562 = vmand %vm546, %vm530
        %vm563 = vmand %vm547, %vm531
        %vm564 = vmand %vm548, %vm532
        %vm565 = vmand %vm549, %vm533
        %vm566 = vmand %vm550, %vm534
        %vm567 = vmand %vm551, %vm535
        %vm568 = vmand %vm552, %vm536
        %vm569 = vmand %vm553, %vm537
        %vm570 = vmand %vm554, %vm538
        %vm571 = vmand %vm555, %vm539
        %vm572 = vmand %vm556, %vm540
        %vm573 = vmand %vm557, %vm541
        %v574 = vadd.s32 %v420, 64
        %v575 = vadd.s32 %v427, 64
        %v576 = vadd.s32 %v434, 64
        %v577 = vadd.s32 %v441, 64
        %v578 = vadd.s32 %v448, 64
        %v579 = vadd.s32 %v455, 64
        %v580 = vadd.s32 %v462, 64
        %v581 = vadd.s32 %v469, 64
        %v582 = vadd.s32 %v476, 64
        %v583 = vadd.s32 %v483, 64
        %v584 = vadd.s32 %v490, 64
        %v585 = vadd.s32 %v497, 64
        %v586 = vadd.s32 %v504, 64
        %v587 = vadd.s32 %v511, 64
        %v588 = vadd.s32 %v518, 64
        %v589 = vadd.s32 %v525, 64
        %v590 = vsel %vm558, %v574, %v420
        %v591 = vsel %vm559, %v575, %v427
        %v592 = vsel %vm560, %v576, %v434
        %v593 = vsel %vm561, %v577, %v441
        %v594 = vsel %vm562, %v578, %v448
        %v595 = vsel %vm563, %v579, %v455
        %v596 = vsel %vm564, %v580, %v462
        %v597 = vsel %vm565, %v581, %v469
        %v598 = vsel %vm566, %v582, %v476
        %v599 = vsel %vm567, %v583, %v483
        %v600 = vsel %vm568, %v584, %v490
        %v601 = vsel %vm569, %v585, %v497
        %v602 = vsel %vm570, %v586, %v504
        %v603 = vsel %vm571, %v587, %v511
        %v604 = vsel %vm572, %v588, %v518
        %v605 = vsel %vm573, %v589, %v525
        %vm606 = vcmp.ne.s32.totalorder %v590, 0
        %vm607 = vcmp.ne.s32.totalorder %v591, 0
        %vm608 = vcmp.ne.s32.totalorder %v592, 0
        %vm609 = vcmp.ne.s32.totalorder %v593, 0
        %vm610 = vcmp.ne.s32.totalorder %v594, 0
        %vm611 = vcmp.ne.s32.totalorder %v595, 0
        %vm612 = vcmp.ne.s32.totalorder %v596, 0
        %vm613 = vcmp.ne.s32.totalorder %v597, 0
        %vm614 = vcmp.ne.s32.totalorder %v598, 0
        %vm615 = vcmp.ne.s32.totalorder %v599, 0
        %vm616 = vcmp.ne.s32.totalorder %v600, 0
        %vm617 = vcmp.ne.s32.totalorder %v601, 0
        %vm618 = vcmp.ne.s32.totalorder %v602, 0
        %vm619 = vcmp.ne.s32.totalorder %v603, 0
        %vm620 = vcmp.ne.s32.totalorder %v604, 0
        %vm621 = vcmp.ne.s32.totalorder %v605, 0
        %vm638 = vcmask 1040384
        %v639 = vrot.slane %v381, 7
        %v640 = vrot.slane %v382, 7
        %v641 = vsel %vm638, %v639, %v640
        %v642 = vrot.slane %v383, 7
        %v643 = vsel %vm638, %v640, %v642
        %v644 = vrot.slane %v384, 7
        %v645 = vsel %vm638, %v642, %v644
        %v646 = vrot.slane %v385, 7
        %v647 = vsel %vm638, %v644, %v646
        %v648 = vrot.slane %v386, 7
        %v649 = vsel %vm638, %v646, %v648
        %v650 = vrot.slane %v387, 7
        %v651 = vsel %vm638, %v648, %v650
        %v652 = vrot.slane %v388, 7
        %v653 = vsel %vm638, %v650, %v652
        %v654 = vrot.slane %v389, 7
        %v655 = vsel %vm638, %v652, %v654
        %v656 = vrot.slane %v390, 7
        %v657 = vsel %vm638, %v654, %v656
        %v658 = vrot.slane %v391, 7
        %v659 = vsel %vm638, %v656, %v658
        %v660 = vrot.slane %v392, 7
        %v661 = vsel %vm638, %v658, %v660
        %v662 = vrot.slane %v393, 7
        %v663 = vsel %vm638, %v660, %v662
        %v664 = vrot.slane %v394, 7
        %v665 = vsel %vm638, %v662, %v664
        %v666 = vrot.slane %v395, 7
        %v667 = vsel %vm638, %v664, %v666
        %v668 = vrot.slane %v396, 7
        %v669 = vsel %vm638, %v666, %v668
        %v686 = vsel %vm638, 0.0, %v639
        %v687 = vsel %vm606, 1, 0
        %v688 = vsel %vm607, 1, 0
        %v689 = vsel %vm608, 1, 0
        %v690 = vsel %vm609, 1, 0
        %v691 = vsel %vm610, 1, 0
        %v692 = vsel %vm611, 1, 0
        %v693 = vsel %vm612, 1, 0
        %v694 = vsel %vm613, 1, 0
        %v695 = vsel %vm614, 1, 0
        %v696 = vsel %vm615, 1, 0
        %v697 = vsel %vm616, 1, 0
        %v698 = vsel %vm617, 1, 0
        %v699 = vsel %vm618, 1, 0
        %v700 = vsel %vm619, 1, 0
        %v701 = vsel %vm620, 1, 0
        %v702 = vsel %vm621, 1, 0
        %vm703 = vcmp.eq.s32.totalorder %v687, 1
        %vm704 = vcmp.eq.s32.totalorder %v688, 1
        %vm705 = vcmp.eq.s32.totalorder %v689, 1
        %vm706 = vcmp.eq.s32.totalorder %v690, 1
        %vm707 = vcmp.eq.s32.totalorder %v691, 1
        %vm708 = vcmp.eq.s32.totalorder %v692, 1
        %vm709 = vcmp.eq.s32.totalorder %v693, 1
        %vm710 = vcmp.eq.s32.totalorder %v694, 1
        %vm711 = vcmp.eq.s32.totalorder %v695, 1
        %vm712 = vcmp.eq.s32.totalorder %v696, 1
        %vm713 = vcmp.eq.s32.totalorder %v697, 1
        %vm714 = vcmp.eq.s32.totalorder %v698, 1
        %vm715 = vcmp.eq.s32.totalorder %v699, 1
        %vm716 = vcmp.eq.s32.totalorder %v700, 1
        %vm717 = vcmp.eq.s32.totalorder %v701, 1
        %vm718 = vcmp.eq.s32.totalorder %v702, 1
        %v719 = vsel %vm703, %v686, 0.0
        %v720 = vsel %vm704, %v641, 0.0
        %v721 = vsel %vm705, %v643, 0.0
        %v722 = vsel %vm706, %v645, 0.0
        %v723 = vsel %vm707, %v647, 0.0
        %v724 = vsel %vm708, %v649, 0.0
        %v725 = vsel %vm709, %v651, 0.0
        %v726 = vsel %vm710, %v653, 0.0
        %v727 = vsel %vm711, %v655, 0.0
        %v728 = vsel %vm712, %v657, 0.0
        %v729 = vsel %vm713, %v659, 0.0
        %v730 = vsel %vm714, %v661, 0.0
        %v731 = vsel %vm715, %v663, 0.0
        %v732 = vsel %vm716, %v665, 0.0
        %v733 = vsel %vm717, %v667, 0.0
        %v734 = vsel %vm718, %v669, 0.0
        %vm735 = vcmp.ne.s32.totalorder %v590, 63
        %vm736 = vcmp.ne.s32.totalorder %v591, 63
        %vm737 = vcmp.ne.s32.totalorder %v592, 63
        %vm738 = vcmp.ne.s32.totalorder %v593, 63
        %vm739 = vcmp.ne.s32.totalorder %v594, 63
        %vm740 = vcmp.ne.s32.totalorder %v595, 63
        %vm741 = vcmp.ne.s32.totalorder %v596, 63
        %vm742 = vcmp.ne.s32.totalorder %v597, 63
        %vm743 = vcmp.ne.s32.totalorder %v598, 63
        %vm744 = vcmp.ne.s32.totalorder %v599, 63
        %vm745 = vcmp.ne.s32.totalorder %v600, 63
        %vm746 = vcmp.ne.s32.totalorder %v601, 63
        %vm747 = vcmp.ne.s32.totalorder %v602, 63
        %vm748 = vcmp.ne.s32.totalorder %v603, 63
        %vm749 = vcmp.ne.s32.totalorder %v604, 63
        %vm750 = vcmp.ne.s32.totalorder %v605, 63
        %vm751 = vcmask 1046528
        %v752 = vrot.slane %v381, 1
        %v753 = vrot.slane %v382, 1
        %v754 = vsel %vm751, %v752, %v753
        %v755 = vrot.slane %v383, 1
        %v756 = vsel %vm751, %v753, %v755
        %v757 = vrot.slane %v384, 1
        %v758 = vsel %vm751, %v755, %v757
        %v759 = vrot.slane %v385, 1
        %v760 = vsel %vm751, %v757, %v759
        %v761 = vrot.slane %v386, 1
        %v762 = vsel %vm751, %v759, %v761
        %v763 = vrot.slane %v387, 1
        %v764 = vsel %vm751, %v761, %v763
        %v765 = vrot.slane %v388, 1
        %v766 = vsel %vm751, %v763, %v765
        %v767 = vrot.slane %v389, 1
        %v768 = vsel %vm751, %v765, %v767
        %v769 = vrot.slane %v390, 1
        %v770 = vsel %vm751, %v767, %v769
        %v771 = vrot.slane %v391, 1
        %v772 = vsel %vm751, %v769, %v771
        %v773 = vrot.slane %v392, 1
        %v774 = vsel %vm751, %v771, %v773
        %v775 = vrot.slane %v393, 1
        %v776 = vsel %vm751, %v773, %v775
        %v777 = vrot.slane %v394, 1
        %v778 = vsel %vm751, %v775, %v777
        %v779 = vrot.slane %v395, 1
        %v780 = vsel %vm751, %v777, %v779
        %v781 = vrot.slane %v396, 1
        %v782 = vsel %vm751, %v779, %v781
        %v799 = vsel %vm751, %v781, 0.0
        %v800 = vsel %vm735, 1, 0
        %v801 = vsel %vm736, 1, 0
        %v802 = vsel %vm737, 1, 0
        %v803 = vsel %vm738, 1, 0
        %v804 = vsel %vm739, 1, 0
        %v805 = vsel %vm740, 1, 0
        %v806 = vsel %vm741, 1, 0
        %v807 = vsel %vm742, 1, 0
        %v808 = vsel %vm743, 1, 0
        %v809 = vsel %vm744, 1, 0
        %v810 = vsel %vm745, 1, 0
        %v811 = vsel %vm746, 1, 0
        %v812 = vsel %vm747, 1, 0
        %v813 = vsel %vm748, 1, 0
        %v814 = vsel %vm749, 1, 0
        %v815 = vsel %vm750, 1, 0
        %vm816 = vcmp.eq.s32.totalorder %v800, 1
        %vm817 = vcmp.eq.s32.totalorder %v801, 1
        %vm818 = vcmp.eq.s32.totalorder %v802, 1
        %vm819 = vcmp.eq.s32.totalorder %v803, 1
        %vm820 = vcmp.eq.s32.totalorder %v804, 1
        %vm821 = vcmp.eq.s32.totalorder %v805, 1
        %vm822 = vcmp.eq.s32.totalorder %v806, 1
        %vm823 = vcmp.eq.s32.totalorder %v807, 1
        %vm824 = vcmp.eq.s32.totalorder %v808, 1
        %vm825 = vcmp.eq.s32.totalorder %v809, 1
        %vm826 = vcmp.eq.s32.totalorder %v810, 1
        %vm827 = vcmp.eq.s32.totalorder %v811, 1
        %vm828 = vcmp.eq.s32.totalorder %v812, 1
        %vm829 = vcmp.eq.s32.totalorder %v813, 1
        %vm830 = vcmp.eq.s32.totalorder %v814, 1
        %vm831 = vcmp.eq.s32.totalorder %v815, 1
        %v832 = vsel %vm816, %v754, 0.0
        %v833 = vsel %vm817, %v756, 0.0
        %v834 = vsel %vm818, %v758, 0.0
        %v835 = vsel %vm819, %v760, 0.0
        %v836 = vsel %vm820, %v762, 0.0
        %v837 = vsel %vm821, %v764, 0.0
        %v838 = vsel %vm822, %v766, 0.0
        %v839 = vsel %vm823, %v768, 0.0
        %v840 = vsel %vm824, %v770, 0.0
        %v841 = vsel %vm825, %v772, 0.0
        %v842 = vsel %vm826, %v774, 0.0
        %v843 = vsel %vm827, %v776, 0.0
        %v844 = vsel %vm828, %v778, 0.0
        %v845 = vsel %vm829, %v780, 0.0
        %v846 = vsel %vm830, %v782, 0.0
        %v847 = vsel %vm831, %v799, 0.0
        %848 = vrot.lane.b32.xlu0 %v381, 64
        %v849 = vpop.permute.xlu0 %848
        %850 = vrot.lane.b32.xlu0 %v382, 64
        %v851 = vpop.permute.xlu0 %850
        %852 = vrot.lane.b32.xlu0 %v383, 64
        %v853 = vpop.permute.xlu0 %852
        %854 = vrot.lane.b32.xlu0 %v384, 64
        %v855 = vpop.permute.xlu0 %854
        %856 = vrot.lane.b32.xlu0 %v385, 64
        %v857 = vpop.permute.xlu0 %856
        %858 = vrot.lane.b32.xlu0 %v386, 64
        %v859 = vpop.permute.xlu0 %858
        %860 = vrot.lane.b32.xlu0 %v387, 64
        %v861 = vpop.permute.xlu0 %860
        %862 = vrot.lane.b32.xlu0 %v388, 64
        %v863 = vpop.permute.xlu0 %862
        %864 = vrot.lane.b32.xlu0 %v389, 64
        %v865 = vpop.permute.xlu0 %864
        %866 = vrot.lane.b32.xlu0 %v390, 64
        %v867 = vpop.permute.xlu0 %866
        %868 = vrot.lane.b32.xlu0 %v391, 64
        %v869 = vpop.permute.xlu0 %868
        %870 = vrot.lane.b32.xlu0 %v392, 64
        %v871 = vpop.permute.xlu0 %870
        %872 = vrot.lane.b32.xlu0 %v393, 64
        %v873 = vpop.permute.xlu0 %872
        %874 = vrot.lane.b32.xlu0 %v394, 64
        %v875 = vpop.permute.xlu0 %874
        %876 = vrot.lane.b32.xlu0 %v395, 64
        %v877 = vpop.permute.xlu0 %876
        %878 = vrot.lane.b32.xlu0 %v396, 64
        %v879 = vpop.permute.xlu0 %878
        %vm896 = vcmask 523264
        %v897 = vsel %vm896, %v719, %v849
        %v898 = vsel %vm896, %v720, %v851
        %v899 = vsel %vm896, %v721, %v853
        %v900 = vsel %vm896, %v722, %v855
        %v901 = vsel %vm896, %v723, %v857
        %v902 = vsel %vm896, %v724, %v859
        %v903 = vsel %vm896, %v725, %v861
        %v904 = vsel %vm896, %v726, %v863
        %v905 = vsel %vm896, %v727, %v865
        %v906 = vsel %vm896, %v728, %v867
        %v907 = vsel %vm896, %v729, %v869
        %v908 = vsel %vm896, %v730, %v871
        %v909 = vsel %vm896, %v731, %v873
        %v910 = vsel %vm896, %v732, %v875
        %v911 = vsel %vm896, %v733, %v877
        %v912 = vsel %vm896, %v734, %v879
        %v913 = vld [vmem:[%s2] sm:$0xff]
        %v914 = vld [vmem:[%s2 + $0x8] sm:$0xff]
        %v915 = vld [vmem:[%s2 + $0x10] sm:$0xff]
        %v916 = vld [vmem:[%s2 + $0x18] sm:$0xff]
        %v917 = vld [vmem:[%s2 + $0x20] sm:$0xff]
        %v918 = vld [vmem:[%s2 + $0x28] sm:$0xff]
        %v919 = vld [vmem:[%s2 + $0x30] sm:$0xff]
        %v920 = vld [vmem:[%s2 + $0x38] sm:$0xff]
        %v921 = vld [vmem:[%s2 + $0x40] sm:$0xff]
        %v922 = vld [vmem:[%s2 + $0x48] sm:$0xff]
        %v923 = vld [vmem:[%s2 + $0x50] sm:$0xff]
        %v924 = vld [vmem:[%s2 + $0x58] sm:$0xff]
        %v925 = vld [vmem:[%s2 + $0x60] sm:$0xff]
        %v926 = vld [vmem:[%s2 + $0x68] sm:$0xff]
        %v927 = vld [vmem:[%s2 + $0x70] sm:$0xff]
        %v928 = vld [vmem:[%s2 + $0x78] sm:$0xff]
        %v929 = vld [vmem:[%s2 + $0x80] sm:$0xff]
        %v930 = vld [vmem:[%s2 + $0x88] sm:$0xff]
        %v931 = vld [vmem:[%s2 + $0x90] sm:$0xff]
        %v932 = vld [vmem:[%s2 + $0x98] sm:$0xff]
        %v933 = vld [vmem:[%s2 + $0xa0] sm:$0xff]
        %v934 = vld [vmem:[%s2 + $0xa8] sm:$0xff]
        %v935 = vld [vmem:[%s2 + $0xb0] sm:$0xff]
        %v936 = vld [vmem:[%s2 + $0xb8] sm:$0xff]
        %v937 = vld [vmem:[%s5] sm:$0x1]
        %v939 = vperm.slane %v937, 0
        %v942 = vsel %vm896, %v832, 0
        %v945 = vsel %vm896, %v833, 0
        %v948 = vsel %vm896, %v834, 0
        %v951 = vsel %vm896, %v835, 0
        %v954 = vsel %vm896, %v836, 0
        %v957 = vsel %vm896, %v837, 0
        %v960 = vsel %vm896, %v838, 0
        %v963 = vsel %vm896, %v839, 0
        %v966 = vsel %vm896, %v840, 0
        %v969 = vsel %vm896, %v841, 0
        %v972 = vsel %vm896, %v842, 0
        %v975 = vsel %vm896, %v843, 0
        %v978 = vsel %vm896, %v844, 0
        %v981 = vsel %vm896, %v845, 0
        %v984 = vsel %vm896, %v846, 0
        %v987 = vsel %vm896, %v847, 0
        %989 = vmatpush.msra.mxu0 %v928
        %990 = vmatpush.msra.mxu0 %v927
        %991 = vmatpush.msra.mxu0 %v926
        %992 = vmatpush.msra.mxu0 %v925
        %993 = vmatpush.msra.mxu0 %v924
        %994 = vmatpush.msra.mxu0 %v923
        %995 = vmatpush.msra.mxu0 %v922
        %996 = vmatpush.msra.mxu0 %v921
        %997 = vmatpush.msra.mxu0 %v920
        %998 = vmatpush.msra.mxu0 %v919
        %999 = vmatpush.msra.mxu0 %v918
        %1000 = vmatpush.msra.mxu0 %v917
        %1001 = vmatpush.msra.mxu0 %v916
        %1002 = vmatpush.msra.mxu0 %v915
        %1003 = vmatpush.msra.mxu0 %v914
        %1004 = vmatpush.msra.mxu0 %v913
        %1005 = vmatmul.f32.gmra.mxu0 %v897
        %v1006 = vpop.f32.mrf.mxu0
        %v1007 = vadd.f32 %v939, %v1006
        %1008 = vmatmul.f32.gmra.mxu0 %v898
        %v1009 = vpop.f32.mrf.mxu0
        %v1010 = vadd.f32 %v939, %v1009
        %1011 = vmatmul.f32.gmra.mxu0 %v899
        %v1012 = vpop.f32.mrf.mxu0
        %v1013 = vadd.f32 %v939, %v1012
        %1014 = vmatmul.f32.gmra.mxu0 %v900
        %v1015 = vpop.f32.mrf.mxu0
        %v1016 = vadd.f32 %v939, %v1015
        %1017 = vmatmul.f32.gmra.mxu0 %v901
        %v1018 = vpop.f32.mrf.mxu0
        %v1019 = vadd.f32 %v939, %v1018
        %1020 = vmatmul.f32.gmra.mxu0 %v902
        %v1021 = vpop.f32.mrf.mxu0
        %v1022 = vadd.f32 %v939, %v1021
        %1023 = vmatmul.f32.gmra.mxu0 %v903
        %v1024 = vpop.f32.mrf.mxu0
        %v1025 = vadd.f32 %v939, %v1024
        %1026 = vmatmul.f32.gmra.mxu0 %v904
        %v1027 = vpop.f32.mrf.mxu0
        %v1028 = vadd.f32 %v939, %v1027
        %1029 = vmatmul.f32.gmra.mxu0 %v905
        %v1030 = vpop.f32.mrf.mxu0
        %v1031 = vadd.f32 %v939, %v1030
        %1032 = vmatmul.f32.gmra.mxu0 %v906
        %v1033 = vpop.f32.mrf.mxu0
        %v1034 = vadd.f32 %v939, %v1033
        %1035 = vmatmul.f32.gmra.mxu0 %v907
        %v1036 = vpop.f32.mrf.mxu0
        %v1037 = vadd.f32 %v939, %v1036
        %1038 = vmatmul.f32.gmra.mxu0 %v908
        %v1039 = vpop.f32.mrf.mxu0
        %v1040 = vadd.f32 %v939, %v1039
        %1041 = vmatmul.f32.gmra.mxu0 %v909
        %v1042 = vpop.f32.mrf.mxu0
        %v1043 = vadd.f32 %v939, %v1042
        %1044 = vmatmul.f32.gmra.mxu0 %v910
        %v1045 = vpop.f32.mrf.mxu0
        %v1046 = vadd.f32 %v939, %v1045
        %1047 = vmatmul.f32.gmra.mxu0 %v911
        %v1048 = vpop.f32.mrf.mxu0
        %v1049 = vadd.f32 %v939, %v1048
        %1050 = vmatmul.f32.gmra.mxu0 %v912
        %v1051 = vpop.f32.mrf.mxu0
        %v1052 = vadd.f32 %v939, %v1051
        %1053 = vdwg.mxu0
        %1054 = vmatpush.msra.mxu0 0.0
        %1055 = vmatpush.msra.mxu0 0.0
        %1056 = vmatpush.msra.mxu0 0.0
        %1057 = vmatpush.msra.mxu0 0.0
        %1058 = vmatpush.msra.mxu0 0.0
        %1059 = vmatpush.msra.mxu0 0.0
        %1060 = vmatpush.msra.mxu0 0.0
        %1061 = vmatpush.msra.mxu0 0.0
        %1062 = vmatpush.msra.mxu0 %v936
        %1063 = vmatpush.msra.mxu0 %v935
        %1064 = vmatpush.msra.mxu0 %v934
        %1065 = vmatpush.msra.mxu0 %v933
        %1066 = vmatpush.msra.mxu0 %v932
        %1067 = vmatpush.msra.mxu0 %v931
        %1068 = vmatpush.msra.mxu0 %v930
        %1069 = vmatpush.msra.mxu0 %v929
        %1070 = vmatmul.f32.gmra.mxu0 %v942
        %v1071 = vpop.f32.mrf.mxu0
        %v1072 = vadd.f32 %v1007, %v1071
        %1073 = vmatmul.f32.gmra.mxu0 %v945
        %v1074 = vpop.f32.mrf.mxu0
        %v1075 = vadd.f32 %v1010, %v1074
        %1076 = vmatmul.f32.gmra.mxu0 %v948
        %v1077 = vpop.f32.mrf.mxu0
        %v1078 = vadd.f32 %v1013, %v1077
        %1079 = vmatmul.f32.gmra.mxu0 %v951
        %v1080 = vpop.f32.mrf.mxu0
        %v1081 = vadd.f32 %v1016, %v1080
        %1082 = vmatmul.f32.gmra.mxu0 %v954
        %v1083 = vpop.f32.mrf.mxu0
        %v1084 = vadd.f32 %v1019, %v1083
        %1085 = vmatmul.f32.gmra.mxu0 %v957
        %v1086 = vpop.f32.mrf.mxu0
        %v1087 = vadd.f32 %v1022, %v1086
        %1088 = vmatmul.f32.gmra.mxu0 %v960
        %v1089 = vpop.f32.mrf.mxu0
        %v1090 = vadd.f32 %v1025, %v1089
        %1091 = vmatmul.f32.gmra.mxu0 %v963
        %v1092 = vpop.f32.mrf.mxu0
        %v1093 = vadd.f32 %v1028, %v1092
        %1094 = vmatmul.f32.gmra.mxu0 %v966
        %v1095 = vpop.f32.mrf.mxu0
        %v1096 = vadd.f32 %v1031, %v1095
        %1097 = vmatmul.f32.gmra.mxu0 %v969
        %v1098 = vpop.f32.mrf.mxu0
        %v1099 = vadd.f32 %v1034, %v1098
        %1100 = vmatmul.f32.gmra.mxu0 %v972
        %v1101 = vpop.f32.mrf.mxu0
        %v1102 = vadd.f32 %v1037, %v1101
        %1103 = vmatmul.f32.gmra.mxu0 %v975
        %v1104 = vpop.f32.mrf.mxu0
        %v1105 = vadd.f32 %v1040, %v1104
        %1106 = vmatmul.f32.gmra.mxu0 %v978
        %v1107 = vpop.f32.mrf.mxu0
        %v1108 = vadd.f32 %v1043, %v1107
        %1109 = vmatmul.f32.gmra.mxu0 %v981
        %v1110 = vpop.f32.mrf.mxu0
        %v1111 = vadd.f32 %v1046, %v1110
        %1112 = vmatmul.f32.gmra.mxu0 %v984
        %v1113 = vpop.f32.mrf.mxu0
        %v1114 = vadd.f32 %v1049, %v1113
        %1115 = vmatmul.f32.gmra.mxu0 %v987
        %v1116 = vpop.f32.mrf.mxu0
        %v1117 = vadd.f32 %v1052, %v1116
        %1118 = vdwg.mxu0
        %v1119 = vmax.f32 %v1072, 0.0
        %v1120 = vmax.f32 %v1075, 0.0
        %v1121 = vmax.f32 %v1078, 0.0
        %v1122 = vmax.f32 %v1081, 0.0
        %v1123 = vmax.f32 %v1084, 0.0
        %v1124 = vmax.f32 %v1087, 0.0
        %v1125 = vmax.f32 %v1090, 0.0
        %v1126 = vmax.f32 %v1093, 0.0
        %v1127 = vmax.f32 %v1096, 0.0
        %v1128 = vmax.f32 %v1099, 0.0
        %v1129 = vmax.f32 %v1102, 0.0
        %v1130 = vmax.f32 %v1105, 0.0
        %v1131 = vmax.f32 %v1108, 0.0
        %v1132 = vmax.f32 %v1111, 0.0
        %v1133 = vmax.f32 %v1114, 0.0
        %v1134 = vmax.f32 %v1117, 0.0
        %v1135 = vld [vmem:[%s3] sm:$0xff]
        %v1136 = vld [vmem:[%s3 + $0x8] sm:$0xff]
        %v1137 = vld [vmem:[%s3 + $0x10] sm:$0xff]
        %v1138 = vld [vmem:[%s3 + $0x18] sm:$0xff]
        %v1139 = vld [vmem:[%s3 + $0x20] sm:$0xff]
        %v1140 = vld [vmem:[%s3 + $0x28] sm:$0xff]
        %v1141 = vld [vmem:[%s3 + $0x30] sm:$0xff]
        %v1142 = vld [vmem:[%s3 + $0x38] sm:$0xff]
        %v1143 = vld [vmem:[%s6] sm:$0x1]
        %v1145 = vperm.slane %v1143, 0
        %v1148 = vsel %vm896, %v1119, 0
        %v1151 = vsel %vm896, %v1120, 0
        %v1154 = vsel %vm896, %v1121, 0
        %v1157 = vsel %vm896, %v1122, 0
        %v1160 = vsel %vm896, %v1123, 0
        %v1163 = vsel %vm896, %v1124, 0
        %v1166 = vsel %vm896, %v1125, 0
        %v1169 = vsel %vm896, %v1126, 0
        %v1172 = vsel %vm896, %v1127, 0
        %v1175 = vsel %vm896, %v1128, 0
        %v1178 = vsel %vm896, %v1129, 0
        %v1181 = vsel %vm896, %v1130, 0
        %v1184 = vsel %vm896, %v1131, 0
        %v1187 = vsel %vm896, %v1132, 0
        %v1190 = vsel %vm896, %v1133, 0
        %v1193 = vsel %vm896, %v1134, 0
        %1195 = vmatpush.msra.mxu0 0.0
        %1196 = vmatpush.msra.mxu0 0.0
        %1197 = vmatpush.msra.mxu0 0.0
        %1198 = vmatpush.msra.mxu0 0.0
        %1199 = vmatpush.msra.mxu0 0.0
        %1200 = vmatpush.msra.mxu0 0.0
        %1201 = vmatpush.msra.mxu0 0.0
        %1202 = vmatpush.msra.mxu0 0.0
        %1203 = vmatpush.msra.mxu0 %v1142
        %1204 = vmatpush.msra.mxu0 %v1141
        %1205 = vmatpush.msra.mxu0 %v1140
        %1206 = vmatpush.msra.mxu0 %v1139
        %1207 = vmatpush.msra.mxu0 %v1138
        %1208 = vmatpush.msra.mxu0 %v1137
        %1209 = vmatpush.msra.mxu0 %v1136
        %1210 = vmatpush.msra.mxu0 %v1135
        %1211 = vmatmul.f32.gmra.mxu0 %v1148
        %v1212 = vpop.f32.mrf.mxu0
        %v1213 = vadd.f32 %v1145, %v1212
        %1214 = vmatmul.f32.gmra.mxu0 %v1151
        %v1215 = vpop.f32.mrf.mxu0
        %v1216 = vadd.f32 %v1145, %v1215
        %1217 = vmatmul.f32.gmra.mxu0 %v1154
        %v1218 = vpop.f32.mrf.mxu0
        %v1219 = vadd.f32 %v1145, %v1218
        %1220 = vmatmul.f32.gmra.mxu0 %v1157
        %v1221 = vpop.f32.mrf.mxu0
        %v1222 = vadd.f32 %v1145, %v1221
        %1223 = vmatmul.f32.gmra.mxu0 %v1160
        %v1224 = vpop.f32.mrf.mxu0
        %v1225 = vadd.f32 %v1145, %v1224
        %1226 = vmatmul.f32.gmra.mxu0 %v1163
        %v1227 = vpop.f32.mrf.mxu0
        %v1228 = vadd.f32 %v1145, %v1227
        %1229 = vmatmul.f32.gmra.mxu0 %v1166
        %v1230 = vpop.f32.mrf.mxu0
        %v1231 = vadd.f32 %v1145, %v1230
        %1232 = vmatmul.f32.gmra.mxu0 %v1169
        %v1233 = vpop.f32.mrf.mxu0
        %v1234 = vadd.f32 %v1145, %v1233
        %1235 = vmatmul.f32.gmra.mxu0 %v1172
        %v1236 = vpop.f32.mrf.mxu0
        %v1237 = vadd.f32 %v1145, %v1236
        %1238 = vmatmul.f32.gmra.mxu0 %v1175
        %v1239 = vpop.f32.mrf.mxu0
        %v1240 = vadd.f32 %v1145, %v1239
        %1241 = vmatmul.f32.gmra.mxu0 %v1178
        %v1242 = vpop.f32.mrf.mxu0
        %v1243 = vadd.f32 %v1145, %v1242
        %1244 = vmatmul.f32.gmra.mxu0 %v1181
        %v1245 = vpop.f32.mrf.mxu0
        %v1246 = vadd.f32 %v1145, %v1245
        %1247 = vmatmul.f32.gmra.mxu0 %v1184
        %v1248 = vpop.f32.mrf.mxu0
        %v1249 = vadd.f32 %v1145, %v1248
        %1250 = vmatmul.f32.gmra.mxu0 %v1187
        %v1251 = vpop.f32.mrf.mxu0
        %v1252 = vadd.f32 %v1145, %v1251
        %1253 = vmatmul.f32.gmra.mxu0 %v1190
        %v1254 = vpop.f32.mrf.mxu0
        %v1255 = vadd.f32 %v1145, %v1254
        %1256 = vmatmul.f32.gmra.mxu0 %v1193
        %v1257 = vpop.f32.mrf.mxu0
        %v1258 = vadd.f32 %v1145, %v1257
        %1259 = vdwg.mxu0
        %v1260 = vadd.f32 %v280, %v1213
        %v1261 = vadd.f32 %v281, %v1216
        %v1262 = vadd.f32 %v282, %v1219
        %v1263 = vadd.f32 %v283, %v1222
        %v1264 = vadd.f32 %v284, %v1225
        %v1265 = vadd.f32 %v285, %v1228
        %v1266 = vadd.f32 %v286, %v1231
        %v1267 = vadd.f32 %v287, %v1234
        %v1268 = vadd.f32 %v288, %v1237
        %v1269 = vadd.f32 %v289, %v1240
        %v1270 = vadd.f32 %v290, %v1243
        %v1271 = vadd.f32 %v291, %v1246
        %v1272 = vadd.f32 %v292, %v1249
        %v1273 = vadd.f32 %v293, %v1252
        %v1274 = vadd.f32 %v294, %v1255
        %v1275 = vadd.f32 %v295, %v1258
        %v1276 = vmax.f32 %v1260, 0.0
        %v1277 = vmax.f32 %v1261, 0.0
        %v1278 = vmax.f32 %v1262, 0.0
        %v1279 = vmax.f32 %v1263, 0.0
        %v1280 = vmax.f32 %v1264, 0.0
        %v1281 = vmax.f32 %v1265, 0.0
        %v1282 = vmax.f32 %v1266, 0.0
        %v1283 = vmax.f32 %v1267, 0.0
        %v1284 = vmax.f32 %v1268, 0.0
        %v1285 = vmax.f32 %v1269, 0.0
        %v1286 = vmax.f32 %v1270, 0.0
        %v1287 = vmax.f32 %v1271, 0.0
        %v1288 = vmax.f32 %v1272, 0.0
        %v1289 = vmax.f32 %v1273, 0.0
        %v1290 = vmax.f32 %v1274, 0.0
        %v1291 = vmax.f32 %v1275, 0.0
        %1292 = vst [vmem:[%s272] sm:$0xff] %v1276
        %1293 = vst [vmem:[%s272 + $0x8] sm:$0xff] %v1277
        %1294 = vst [vmem:[%s272 + $0x10] sm:$0xff] %v1278
        %1295 = vst [vmem:[%s272 + $0x18] sm:$0xff] %v1279
        %1296 = vst [vmem:[%s272 + $0x20] sm:$0xff] %v1280
        %1297 = vst [vmem:[%s272 + $0x28] sm:$0xff] %v1281
        %1298 = vst [vmem:[%s272 + $0x30] sm:$0xff] %v1282
        %1299 = vst [vmem:[%s272 + $0x38] sm:$0xff] %v1283
        %1300 = vst [vmem:[%s272 + $0x40] sm:$0xff] %v1284
        %1301 = vst [vmem:[%s272 + $0x48] sm:$0xff] %v1285
        %1302 = vst [vmem:[%s272 + $0x50] sm:$0xff] %v1286
        %1303 = vst [vmem:[%s272 + $0x58] sm:$0xff] %v1287
        %1304 = vst [vmem:[%s272 + $0x60] sm:$0xff] %v1288
        %1305 = vst [vmem:[%s272 + $0x68] sm:$0xff] %v1289
        %1306 = vst [vmem:[%s272 + $0x70] sm:$0xff] %v1290
        %1307 = vst [vmem:[%s272 + $0x78] sm:$0xff] %v1291
        %s1308 = sand.u32 %s181, 1
        %s1309 = scalar_lea.sflag [#allocation3], %s1308
        %s1310 = sand.u32 %s181, 1
        %s1311 = smul.addr %s1310, 128
        %s1312 = scalar_lea.vmem [#allocation2], %s1311
        // Predicated region
        $region49: #{tpu_custom_call.1} parent=47 // pred_check
          %p1313 = pneg %p191
        $region50: #{tpu_custom_call.1} parent=47 // pred_check_branch
          %1315 = sbr.rel (%p1313) target = $region52
        $region51: #{tpu_custom_call.1} parent=47 // pred_region
          %s1316 = smul.u32 16, %s21
          %1318 = vsyncadd %s1309, 0
          %s1319 = smul.addr %s1316, 8
          %s1320 = scalar_lea.hbm %s7, %s1319
          %s1321 = sshll.u32 %s1312, 4
          %s1322 = int_to_ptr.vmem [resolvable:$true] %s1321
          %s1323 = sshll.u32 %s1320, 4
          %s1324 = int_to_ptr.hbm [resolvable:$true] %s1323
          %1329 = dma.vmem_to_hbm [thread:$0]  %s1322, 2048, %s1324, %s1309, 128, 128, 8
        $region52: #{tpu_custom_call.1} parent=47 // pred_fallthru
          _
      $region48: #{tpu_custom_call.1} parent=5 // pred_fallthru
        _
      %p1330 = scmp.le.s32.totalorder 2, %s16
      // Predicated region
      $region53: #{tpu_custom_call.1} parent=5 // pred_check
        %p1331 = pneg %p1330
      $region54: #{tpu_custom_call.1} parent=5 // pred_check_branch
        %1333 = sbr.rel (%p1331) target = $region56
      $region55: #{tpu_custom_call.1} parent=5 // pred_region
        %s1334 = ssub.s32 %s16, 2
        // Predicated region
        $region57: #{tpu_custom_call.1} parent=55 // pred_check
          %p1335 = pneg %p197
        $region58: #{tpu_custom_call.1} parent=55 // pred_check_branch
          %1337 = sbr.rel (%p1335) target = $region60
        $region59: #{tpu_custom_call.1} parent=55 // pred_region
          %s1338 = sand.u32 %s182, 1
          %s1339 = scalar_lea.sflag [#allocation3], %s1338
          %s1340 = sand.u32 %s182, 1
          %s1341 = smul.addr %s1340, 128
          %s1342 = scalar_lea.vmem [#allocation2], %s1341
          %1344 = dma.done %s1339, 2048
        $region60: #{tpu_custom_call.1} parent=55 // pred_fallthru
          _
      $region56: #{tpu_custom_call.1} parent=5 // pred_fallthru
        _
    $region6: #{tpu_custom_call.1} parent=1 // loop_footer
      %s20 = sadd.s32 1, %s16
    $region7: #{tpu_custom_call.1} parent=1 // loop_footer_branch
      %15 = sbr.rel target = $region3
    $region8: #{tpu_custom_call.1} parent=1 // loop_exit
      _
    %1345 = vsyncpa [#allocation3], 1
    %s1346 = scalar_lea.sflag [#allocation3], 1
    %1347 = vsyncpa %s1346, 1

</llo_original>
